<compile_context>
chip_gen: v7x
topology: tpu7x:2x2x1
jax: 0.10.0
libtpu: 0.0.40
codegen_flags: <defaults>
</compile_context>

<pallas_src>
import functools

import jax
import jax.numpy as jnp
from jax.experimental import pallas as pl
from jax.experimental.pallas import tpu as pltpu


LANE = 128          # lane width: pad in_dim / out_dim to multiples of this
DEFAULT_TILE_N = 128  # row tile (must be a multiple of 8)


def _round_up(x, m):
    return ((x + m - 1) // m) * m


# ---------------------------------------------------------------------------
# Kernels
# ---------------------------------------------------------------------------
def _grouped_linear_bias_kernel(tid_ref, x_ref, w_ref, b_ref, o_ref):
    # x_ref: [TILE_N, K_pad]   w_ref: [K_pad, O_pad]   b_ref: [1, O_pad]
    # MXU matmul with f32 accumulation (weight already stored [K, O]: no .T).
    acc = jnp.dot(x_ref[...], w_ref[...], preferred_element_type=jnp.float32)
    acc = acc + b_ref[...].astype(jnp.float32)
    o_ref[...] = acc.astype(o_ref.dtype)


def _grouped_linear_nobias_kernel(tid_ref, x_ref, w_ref, o_ref):
    acc = jnp.dot(x_ref[...], w_ref[...], preferred_element_type=jnp.float32)
    o_ref[...] = acc.astype(o_ref.dtype)


# ---------------------------------------------------------------------------
# Fused pallas_call wrapper
# ---------------------------------------------------------------------------
@functools.partial(jax.jit, static_argnames=("tile_n", "use_bias"))
def _grouped_linear(block_type_ids, x_pad, w_stack, b_stack, *, tile_n,
                    use_bias):
    """x_pad: [N_pad, K_pad] row slab (N_pad multiple of tile_n)
       w_stack: [num_types, K_pad, O_pad] (pre-transposed, zero padded)
       b_stack: [num_types, 1, O_pad]
       block_type_ids: [N_pad // tile_n] int32 -> which type each row block is.
    """
    n_pad, k_pad = x_pad.shape
    o_pad = w_stack.shape[-1]
    num_blocks = n_pad // tile_n

    # index_maps receive the scalar-prefetch ref (tid) as a trailing arg.
    x_spec = pl.BlockSpec((tile_n, k_pad), lambda i, tid: (i, 0))
    w_spec = pl.BlockSpec((None, k_pad, o_pad), lambda i, tid: (tid[i], 0, 0))
    b_spec = pl.BlockSpec((None, 1, o_pad), lambda i, tid: (tid[i], 0, 0))
    o_spec = pl.BlockSpec((tile_n, o_pad), lambda i, tid: (i, 0))

    if use_bias:
        kernel = _grouped_linear_bias_kernel
        in_specs = [x_spec, w_spec, b_spec]
        operands = (block_type_ids, x_pad, w_stack, b_stack)
    else:
        kernel = _grouped_linear_nobias_kernel
        in_specs = [x_spec, w_spec]
        operands = (block_type_ids, x_pad, w_stack)

    return pl.pallas_call(
        kernel,
        out_shape=jax.ShapeDtypeStruct((n_pad, o_pad), x_pad.dtype),
        grid_spec=pltpu.PrefetchScalarGridSpec(
            num_scalar_prefetch=1,
            grid=(num_blocks,),
            in_specs=in_specs,
            out_specs=o_spec,
        ),
        compiler_params=pltpu.CompilerParams(
            # Each row block is independent -> shard across TensorCores (v7x).
            dimension_semantics=("parallel",),
        ),
    )(*operands)


# ---------------------------------------------------------------------------
# Module
# ---------------------------------------------------------------------------
class HeteroLinearLayer:
    """JAX/Pallas port of the PyTorch HeteroLinearLayer.

    One (weight, bias) pair per node type; forward applies the corresponding
    linear map to each entry of the input feature dict.  All node types are
    executed by a single fused grouped-matmul pallas_call.
    """

    def __init__(self, in_dim_dict, out_dim, bias=True, *, key=None,
                 dtype=jnp.float32, tile_n=DEFAULT_TILE_N):
        self.out_dim = out_dim
        self.use_bias = bias
        self.tile_n = tile_n
        if key is None:
            key = jax.random.PRNGKey(0)

        self.ntypes = [nt for nt, d in sorted(in_dim_dict.items()) if d > 0]
        self.in_dims = {nt: in_dim_dict[nt] for nt in self.ntypes}
        self.type_index = {nt: i for i, nt in enumerate(self.ntypes)}

        self.k_pad = _round_up(max(self.in_dims.values()), LANE)
        self.o_pad = _round_up(out_dim, LANE)

        self.params = {}       # raw nn.Linear-style params (for reference)
        w_list, b_list = [], []
        for nt in self.ntypes:
            in_dim = self.in_dims[nt]
            key, wk, bk = jax.random.split(key, 3)
            # nn.Linear default init: U(-1/sqrt(in_dim), 1/sqrt(in_dim))
            bound = 1.0 / (in_dim ** 0.5)
            w = jax.random.uniform(wk, (out_dim, in_dim), dtype=dtype,
                                   minval=-bound, maxval=bound)
            if bias:
                b = jax.random.uniform(bk, (out_dim,), dtype=dtype,
                                       minval=-bound, maxval=bound)
            else:
                b = jnp.zeros((out_dim,), dtype=dtype)
            self.params[nt] = (w, b)

            # Pre-transpose once to [in_dim, out_dim] and zero-pad to
            # [K_pad, O_pad] so the kernel does a plain x @ W with lane-dense
            # output and no masked partial stores.
            w_t = jnp.zeros((self.k_pad, self.o_pad), dtype=dtype)
            w_t = w_t.at[:in_dim, :out_dim].set(w.T)
            b_p = jnp.zeros((1, self.o_pad), dtype=dtype)
            b_p = b_p.at[0, :out_dim].set(b)
            w_list.append(w_t)
            b_list.append(b_p)

        self.w_stack = jnp.stack(w_list)   # [num_types, K_pad, O_pad]
        self.b_stack = jnp.stack(b_list)   # [num_types, 1, O_pad]

    def __call__(self, h_dict):
        tile_n = self.tile_n

        # Build one padded row slab + per-row-block type-id table.
        slabs, block_ids, spans = [], [], {}
        offset = 0
        for nt, h in h_dict.items():
            tidx = self.type_index[nt]          # KeyError if type has no linear
            n, d = h.shape
            n_pad = max(_round_up(n, tile_n), tile_n)
            x_pad = jnp.zeros((n_pad, self.k_pad), dtype=h.dtype)
            x_pad = x_pad.at[:n, :d].set(h)
            slabs.append(x_pad)
            block_ids.extend([tidx] * (n_pad // tile_n))
            spans[nt] = (offset, n)
            offset += n_pad

        x_slab = jnp.concatenate(slabs, axis=0)          # [N_pad, K_pad]
        tid = jnp.asarray(block_ids, dtype=jnp.int32)    # [num_blocks]

        y_slab = _grouped_linear(tid, x_slab, self.w_stack, self.b_stack,
                                 tile_n=tile_n, use_bias=self.use_bias)

        out = {}
        for nt in h_dict:
            start, n = spans[nt]
            out[nt] = y_slab[start:start + n, :self.out_dim]
        return out


# ---------------------------------------------------------------------------
# Demo / correctness check
# ---------------------------------------------------------------------------
if __name__ == "__main__":
    key = jax.random.PRNGKey(0)

    # Small synthetic heterogeneous graph features.
    in_dim_dict = {"user": 16, "item": 24, "tag": 8}
    out_dim = 32
    num_nodes = {"user": 8, "item": 16, "tag": 8}

    layer = HeteroLinearLayer(in_dim_dict, out_dim, bias=True,
                              key=jax.random.PRNGKey(42))

    h_dict = {}
    for ntype, in_dim in sorted(in_dim_dict.items()):
        key, sub = jax.random.split(key)
        h_dict[ntype] = jax.random.normal(
            sub, (num_nodes[ntype], in_dim), dtype=jnp.float32
        )

    out_dict = layer(h_dict)
    for ntype, y in out_dict.items():
        jax.block_until_ready(y)

    # Reference check against plain JAX (same semantics as torch nn.Linear).
    for ntype, h in h_dict.items():
        w, b = layer.params[ntype]
        ref = h @ w.T + b
        assert out_dict[ntype].shape == (num_nodes[ntype], out_dim)
        assert jnp.allclose(out_dict[ntype], ref, atol=2e-5, rtol=2e-5), ntype

    print("KERNEL_OK")
</pallas_src>

<mosaic_0001>
module attributes {stable_mosaic.version = 11 : i64} {
  func.func @_grouped_linear_bias_kernel(%arg0: i32, %arg1: memref<3xi32, #tpu.memory_space<smem>>, %arg2: memref<128x128xf32, #tpu.memory_space<vmem>>, %arg3: memref<1x128x128xf32, #tpu.memory_space<vmem>>, %arg4: memref<1x1x128xf32, #tpu.memory_space<vmem>>, %arg5: memref<128x128xf32, #tpu.memory_space<vmem>>) attributes {dimension_semantics = [#tpu.dimension_semantics<parallel>], iteration_bounds = array<i64: 3>, scalar_prefetch = 1 : i64, scratch_operands = 0 : i64, tpu.core_type = #tpu.core_type<tc>, window_params = [{transform_indices = @transform_0, window_bounds = array<i64: 128, 128>}, {transform_indices = @transform_1, window_bounds = array<i64: 1, 128, 128>}, {transform_indices = @transform_2, window_bounds = array<i64: 1, 1, 128>}, {transform_indices = @transform_3, window_bounds = array<i64: 128, 128>}]} {
    %c0 = arith.constant 0 : index
    %c0_0 = arith.constant 0 : index
    %0 = vector.load %arg2[%c0, %c0_0] : memref<128x128xf32, #tpu.memory_space<vmem>>, vector<128x128xf32>
    %c0_1 = arith.constant 0 : index
    %c0_2 = arith.constant 0 : index
    %c0_3 = arith.constant 0 : index
    %1 = vector.load %arg3[%c0_1, %c0_2, %c0_3] : memref<1x128x128xf32, #tpu.memory_space<vmem>>, vector<1x128x128xf32>
    %2 = vector.shape_cast %1 : vector<1x128x128xf32> to vector<128x128xf32>
    %cst = arith.constant dense<0.000000e+00> : vector<128x128xf32>
    %3 = tpu.matmul %0, %2, %cst {dimension_numbers = #tpu.dot_dimension_numbers<[1], [0], [0], [1], [0, 0, 1, 1], [], []>} : vector<128x128xf32>, vector<128x128xf32>, vector<128x128xf32> -> vector<128x128xf32>
    %c0_4 = arith.constant 0 : index
    %c0_5 = arith.constant 0 : index
    %c0_6 = arith.constant 0 : index
    %4 = vector.load %arg4[%c0_4, %c0_5, %c0_6] : memref<1x1x128xf32, #tpu.memory_space<vmem>>, vector<1x1x128xf32>
    %5 = vector.shape_cast %4 : vector<1x1x128xf32> to vector<1x128xf32>
    %6 = vector.broadcast %5 : vector<1x128xf32> to vector<128x128xf32>
    %7 = arith.addf %3, %6 : vector<128x128xf32>
    %c0_7 = arith.constant 0 : index
    %c0_8 = arith.constant 0 : index
    %8 = vector.load %arg5[%c0_7, %c0_8] : memref<128x128xf32, #tpu.memory_space<vmem>>, vector<128x128xf32>
    tpu.vector_store %arg5[%c0_7, %c0_8], %7 {strides = array<i32>} : memref<128x128xf32, #tpu.memory_space<vmem>>, vector<128x128xf32>,
    return
  }
  func.func @transform_0(%arg0: i32, %arg1: memref<3xi32, #tpu.memory_space<smem>>) -> (i32, i32) {
    %c0_i32 = arith.constant 0 : i32
    %c0_i32_0 = arith.constant 0 : i32
    return %arg0, %c0_i32 : i32, i32
  }
  func.func @transform_1(%arg0: i32, %arg1: memref<3xi32, #tpu.memory_space<smem>>) -> (i32, i32, i32) {
    %0 = arith.index_cast %arg0 : i32 to index
    %1 = memref.load %arg1[%0] : memref<3xi32, #tpu.memory_space<smem>>
    %c0_i32 = arith.constant 0 : i32
    %c0_i32_0 = arith.constant 0 : i32
    %c0_i32_1 = arith.constant 0 : i32
    return %1, %c0_i32, %c0_i32_0 : i32, i32, i32
  }
  func.func @transform_2(%arg0: i32, %arg1: memref<3xi32, #tpu.memory_space<smem>>) -> (i32, i32, i32) {
    %0 = arith.index_cast %arg0 : i32 to index
    %1 = memref.load %arg1[%0] : memref<3xi32, #tpu.memory_space<smem>>
    %c0_i32 = arith.constant 0 : i32
    %c0_i32_0 = arith.constant 0 : i32
    %c0_i32_1 = arith.constant 0 : i32
    return %1, %c0_i32, %c0_i32_0 : i32, i32, i32
  }
  func.func @transform_3(%arg0: i32, %arg1: memref<3xi32, #tpu.memory_space<smem>>) -> (i32, i32) {
    %c0_i32 = arith.constant 0 : i32
    %c0_i32_0 = arith.constant 0 : i32
    return %arg0, %c0_i32 : i32, i32
  }
}

</mosaic_0001>

<llo_original>
// kernel: _grouped_linear.1
$region0: #{_grouped_linear.1}
  #allocation0 [shape = 'u32[]', space=smem, size = 0x4, offset = 0x4, fixed_abs, tag = 'smem constant byte address 0x4 - core index']
  #allocation1 [shape = 'u32[144,128]{1,0:T(1,128)}', space=vmem, size = 0x12000, scoped, tag = 'internal scratch']
  #allocation2 [shape = 's32[1]{0}', space=sflag, size = 0x4, scoped, tag = 'scoped memory for _grouped_linear.1']
  #allocation3 [shape = 'u8[512]{0}', space=smem, size = 0x200, scoped, tag = 'prefetched SMEM operand 0']
  %s0 = inlined_call_operand.hbm [shape: s32[3], index: 0, kind: input, shape index: {}]
  %s1 = inlined_call_operand.hbm [shape: f32[384,128], index: 1, kind: input, shape index: {}]
  %s2 = inlined_call_operand.hbm [shape: f32[3,128,128], index: 2, kind: input, shape index: {}]
  %s3 = inlined_call_operand.vmem [shape: f32[3,1,128], index: 3, kind: input, shape index: {}]
  %s4 = inlined_call_operand.hbm [shape: f32[384,128], index: 4, kind: output, shape index: {}]
  %s5 = sld [smem:[#allocation0]]
  $region53: #{_grouped_linear.1} parent=0
    _
  %s7 = ssub.s32 1, %s5
  %s8 = scalar_select 0, %s7, %s5
  %10 = dma.hbm_to_smem %s0, 16, [#allocation3], [#allocation2]
  %11 = dma.done [#allocation2], 16
  %12 = sfence
  $region1: #{_grouped_linear.1} parent=0
    #allocation4 [shape = 'u8[131072]{0}', space=vmem, size = 0x20000, scoped, tag = 'input window, operand 1']
    #allocation5 [shape = 's32[2]{0}', space=sflag, size = 0x8, scoped, tag = 'scoped memory for _grouped_linear.1']
    #allocation6 [shape = 's32[2]{0}', space=sflag, size = 0x8, scoped, tag = 'scoped memory for _grouped_linear.1']
    #allocation7 [shape = 'u8[131072]{0}', space=vmem, size = 0x20000, scoped, tag = 'input window, operand 2']
    #allocation8 [shape = 's32[2]{0}', space=sflag, size = 0x8, scoped, tag = 'scoped memory for _grouped_linear.1']
    #allocation9 [shape = 'u8[131072]{0}', space=vmem, size = 0x20000, scoped, tag = 'output window, operand 0']
    %13 = vsyncpa [#allocation5], 0
    %s14 = scalar_lea.sflag [#allocation5], 1
    %15 = vsyncpa %s14, 0
    %16 = vsyncpa [#allocation8], 0
    %s17 = scalar_lea.sflag [#allocation8], 1
    %18 = vsyncpa %s17, 0
    %19 = vsyncpa [#allocation6], 0
    %s20 = scalar_lea.sflag [#allocation6], 1
    %21 = vsyncpa %s20, 0
    loop: start=0, step=1, limit=5
    $region2: #{_grouped_linear.1} parent=1 // loop_pre_header
      _
    $region3: #{_grouped_linear.1} parent=1 // loop_header
      %s23 = sphi 0, %s27
      %p24 = scmp.ge.s32.totalorder %s23, 5
      %s33 = sphi 0, %s35
      %s36 = sphi 0, %s33
      %s37 = sphi 0, %s36
      %s53 = sphi 0, %s37
      %s61 = sphi 0, %s63
      %s64 = sphi 0, %s61
      %s65 = sphi 0, %s64
      %s81 = sphi 0, %s65
      %s89 = sphi 0, %s91
      %s92 = sphi 0, %s89
      %s93 = sphi 0, %s92
      %s109 = sphi 0, %s93
      %s115 = sphi 0, %s117
      %s118 = sphi 0, %s115
      %s119 = sphi 0, %s118
      %s135 = sphi 0, %s119
    $region4: #{_grouped_linear.1} parent=1 // loop_header_branch
      %26 = sbr.rel (%p24) target = $region8
    $region5: #{_grouped_linear.1} parent=1 // loop_body
      %s28 = ssub.s32 %s23, 1
      %s29 = ssub.s32 %s23, 2
      %s30 = sadd.s32 %s23, 1
      %s31 = ssub.s32 %s23, %s30
      %p32 = scmp.eq.s32.totalorder %s31, 0
      %s34 = sadd.s32 %s33, 1
      %s35 = scalar_select %p32, %s33, %s34
      %p38 = pneg %p32
      %p39 = scmp.eq.s32.totalorder %s23, 2
      %p40 = por %p38, %p39
      %p41 = scmp.ne.s32.totalorder %s33, %s36
      %p42 = scmp.eq.s32.totalorder %s23, 0
      %p43 = por %p41, %p42
      %p44 = scmp.ne.s32.totalorder %s33, %s36
      %p45 = scmp.eq.s32.totalorder %s28, 2
      %p46 = por %p44, %p45
      %p47 = scmp.ne.s32.totalorder %s36, %s37
      %p48 = scmp.eq.s32.totalorder %s28, 0
      %p49 = por %p47, %p48
      %p50 = scmp.ne.s32.totalorder %s36, %s37
      %p51 = scmp.eq.s32.totalorder %s29, 2
      %p52 = por %p50, %p51
      %p54 = scmp.ne.s32.totalorder %s37, %s53
      %p55 = scmp.eq.s32.totalorder %s29, 0
      %p56 = por %p54, %p55
      %s57 = sld [smem:[#allocation3 + %s23]]
      %s58 = sld [smem:[#allocation3 + %s30]]
      %s59 = ssub.s32 %s57, %s58
      %p60 = scmp.eq.s32.totalorder %s59, 0
      %s62 = sadd.s32 %s61, 1
      %s63 = scalar_select %p60, %s61, %s62
      %p66 = pneg %p60
      %p67 = scmp.eq.s32.totalorder %s23, 2
      %p68 = por %p66, %p67
      %p69 = scmp.ne.s32.totalorder %s61, %s64
      %p70 = scmp.eq.s32.totalorder %s23, 0
      %p71 = por %p69, %p70
      %p72 = scmp.ne.s32.totalorder %s61, %s64
      %p73 = scmp.eq.s32.totalorder %s28, 2
      %p74 = por %p72, %p73
      %p75 = scmp.ne.s32.totalorder %s64, %s65
      %p76 = scmp.eq.s32.totalorder %s28, 0
      %p77 = por %p75, %p76
      %p78 = scmp.ne.s32.totalorder %s64, %s65
      %p79 = scmp.eq.s32.totalorder %s29, 2
      %p80 = por %p78, %p79
      %p82 = scmp.ne.s32.totalorder %s65, %s81
      %p83 = scmp.eq.s32.totalorder %s29, 0
      %p84 = por %p82, %p83
      %s85 = sld [smem:[#allocation3 + %s23]]
      %s86 = sld [smem:[#allocation3 + %s30]]
      %s87 = ssub.s32 %s85, %s86
      %p88 = scmp.eq.s32.totalorder %s87, 0
      %s90 = sadd.s32 %s89, 1
      %s91 = scalar_select %p88, %s89, %s90
      %p94 = pneg %p88
      %p95 = scmp.eq.s32.totalorder %s23, 2
      %p96 = por %p94, %p95
      %p97 = scmp.ne.s32.totalorder %s89, %s92
      %p98 = scmp.eq.s32.totalorder %s23, 0
      %p99 = por %p97, %p98
      %p100 = scmp.ne.s32.totalorder %s89, %s92
      %p101 = scmp.eq.s32.totalorder %s28, 2
      %p102 = por %p100, %p101
      %p103 = scmp.ne.s32.totalorder %s92, %s93
      %p104 = scmp.eq.s32.totalorder %s28, 0
      %p105 = por %p103, %p104
      %p106 = scmp.ne.s32.totalorder %s92, %s93
      %p107 = scmp.eq.s32.totalorder %s29, 2
      %p108 = por %p106, %p107
      %p110 = scmp.ne.s32.totalorder %s93, %s109
      %p111 = scmp.eq.s32.totalorder %s29, 0
      %p112 = por %p110, %p111
      %s113 = ssub.s32 %s23, %s30
      %p114 = scmp.eq.s32.totalorder %s113, 0
      %s116 = sadd.s32 %s115, 1
      %s117 = scalar_select %p114, %s115, %s116
      %p120 = pneg %p114
      %p121 = scmp.eq.s32.totalorder %s23, 2
      %p122 = por %p120, %p121
      %p123 = scmp.ne.s32.totalorder %s115, %s118
      %p124 = scmp.eq.s32.totalorder %s23, 0
      %p125 = por %p123, %p124
      %p126 = scmp.ne.s32.totalorder %s115, %s118
      %p127 = scmp.eq.s32.totalorder %s28, 2
      %p128 = por %p126, %p127
      %p129 = scmp.ne.s32.totalorder %s118, %s119
      %p130 = scmp.eq.s32.totalorder %s28, 0
      %p131 = por %p129, %p130
      %p132 = scmp.ne.s32.totalorder %s118, %s119
      %p133 = scmp.eq.s32.totalorder %s29, 2
      %p134 = por %p132, %p133
      %p136 = scmp.ne.s32.totalorder %s119, %s135
      %p137 = scmp.eq.s32.totalorder %s29, 0
      %p138 = por %p136, %p137
      %p139 = scmp.le.s32.totalorder 1, %s23
      %p140 = scmp.lt.s32.totalorder %s23, 4
      %p141 = pnand %p139, %p140
      %p142 = pneg %p141
      // Predicated region
      $region9: #{_grouped_linear.1} parent=5 // pred_check
        _
      $region10: #{_grouped_linear.1} parent=5 // pred_check_branch
        %144 = sbr.rel (%p141) target = $region12
      $region11: #{_grouped_linear.1} parent=5 // pred_region
        %s145 = ssub.s32 %s23, 1
      $region12: #{_grouped_linear.1} parent=5 // pred_fallthru
        _
      %p146 = scmp.lt.s32.totalorder %s23, 3
      // Predicated region
      $region13: #{_grouped_linear.1} parent=5 // pred_check
        %p147 = pneg %p146
      $region14: #{_grouped_linear.1} parent=5 // pred_check_branch
        %149 = sbr.rel (%p147) target = $region16
      $region15: #{_grouped_linear.1} parent=5 // pred_region
        // Predicated region
        $region17: #{_grouped_linear.1} parent=15 // pred_check
          %p150 = pneg %p43
        $region18: #{_grouped_linear.1} parent=15 // pred_check_branch
          %152 = sbr.rel (%p150) target = $region20
        $region19: #{_grouped_linear.1} parent=15 // pred_region
          %s153 = sand.u32 %s33, 1
          %s154 = scalar_lea.sflag [#allocation5], %s153
          %s155 = sand.u32 %s33, 1
          %s156 = smul.addr %s155, 128
          %s157 = scalar_lea.vmem [#allocation4], %s156
          %s158 = smul.u32 16, %s23
          %s160 = ssub.s32 2048, 2048
          %161 = vsyncadd %s154, %s160
          %s162 = smul.addr %s158, 128
          %s163 = scalar_lea.hbm %s1, %s162
          %s164 = sshll.u32 %s157, 4
          %s165 = int_to_ptr.vmem [resolvable:$true] %s164
          %170 = dma.hbm_to_vmem [thread:$0]  %s163, 2048, %s165, %s154, 128, 128, 8
        $region20: #{_grouped_linear.1} parent=15 // pred_fallthru
          _
        // Predicated region
        $region21: #{_grouped_linear.1} parent=15 // pred_check
          %p171 = pneg %p71
        $region22: #{_grouped_linear.1} parent=15 // pred_check_branch
          %173 = sbr.rel (%p171) target = $region24
        $region23: #{_grouped_linear.1} parent=15 // pred_region
          %s174 = sand.u32 %s61, 1
          %s175 = scalar_lea.sflag [#allocation8], %s174
          %s176 = sand.u32 %s61, 1
          %s177 = smul.addr %s176, 128
          %s178 = scalar_lea.vmem [#allocation7], %s177
          %s179 = sld [smem:[#allocation3 + %s23]]
          %s181 = ssub.s32 2048, 2048
          %182 = vsyncadd %s175, %s181
          %s183 = smul.addr %s179, 16
          %s184 = smul.addr %s183, 128
          %s185 = scalar_lea.hbm %s2, %s184
          %s186 = sshll.u32 %s178, 4
          %s187 = int_to_ptr.vmem [resolvable:$true] %s186
          %192 = dma.hbm_to_vmem [thread:$0]  %s185, 2048, %s187, %s175, 128, 128, 8
        $region24: #{_grouped_linear.1} parent=15 // pred_fallthru
          _
        // Predicated region
        $region25: #{_grouped_linear.1} parent=15 // pred_check
          %p193 = pneg %p99
        $region26: #{_grouped_linear.1} parent=15 // pred_check_branch
          %195 = sbr.rel (%p193) target = $region28
        $region27: #{_grouped_linear.1} parent=15 // pred_region
          %s196 = sld [smem:[#allocation3 + %s23]]
          %p197 = scmp.lt.s32.totalorder %s196, 2
          %s198 = scalar_select %p197, %s196, 2
          %s199 = scalar_lea.vmem %s3, %s198
          %s200 = sld [smem:[#allocation3 + %s23]]
        $region28: #{_grouped_linear.1} parent=15 // pred_fallthru
          _
      $region16: #{_grouped_linear.1} parent=5 // pred_fallthru
        _
      %p201 = scmp.le.s32.totalorder 1, %s23
      %p202 = scmp.lt.s32.totalorder %s23, 4
      %p203 = pnand %p201, %p202
      %p204 = pneg %p203
      // Predicated region
      $region29: #{_grouped_linear.1} parent=5 // pred_check
        _
      $region30: #{_grouped_linear.1} parent=5 // pred_check_branch
        %206 = sbr.rel (%p203) target = $region32
      $region31: #{_grouped_linear.1} parent=5 // pred_region
        %s207 = ssub.s32 %s23, 1
        %s208 = sand.u32 %s36, 1
        %s209 = scalar_lea.sflag [#allocation5], %s208
        %s210 = sand.u32 %s36, 1
        %s211 = smul.addr %s210, 128
        %s212 = scalar_lea.vmem [#allocation4], %s211
        // Predicated region
        $region33: #{_grouped_linear.1} parent=31 // pred_check
          %p213 = pneg %p49
        $region34: #{_grouped_linear.1} parent=31 // pred_check_branch
          %215 = sbr.rel (%p213) target = $region36
        $region35: #{_grouped_linear.1} parent=31 // pred_region
          %216 = dma.done %s209, 2048
        $region36: #{_grouped_linear.1} parent=31 // pred_fallthru
          _
        %s217 = sand.u32 %s64, 1
        %s218 = scalar_lea.sflag [#allocation8], %s217
        %s219 = sand.u32 %s64, 1
        %s220 = smul.addr %s219, 128
        %s221 = scalar_lea.vmem [#allocation7], %s220
        // Predicated region
        $region37: #{_grouped_linear.1} parent=31 // pred_check
          %p222 = pneg %p77
        $region38: #{_grouped_linear.1} parent=31 // pred_check_branch
          %224 = sbr.rel (%p222) target = $region40
        $region39: #{_grouped_linear.1} parent=31 // pred_region
          %225 = dma.done %s218, 2048
        $region40: #{_grouped_linear.1} parent=31 // pred_fallthru
          _
        %s226 = sand.u32 %s36, 1
        %s227 = scalar_lea.sflag [#allocation5], %s226
        %s228 = sand.u32 %s36, 1
        %s229 = smul.addr %s228, 128
        %s230 = scalar_lea.vmem [#allocation4], %s229
        %p231 = pneg %p49
        %p232 = pneg %p46
        %s233 = sand.u32 %s64, 1
        %s234 = scalar_lea.sflag [#allocation8], %s233
        %s235 = sand.u32 %s64, 1
        %s236 = smul.addr %s235, 128
        %s237 = scalar_lea.vmem [#allocation7], %s236
        %p238 = pneg %p77
        %p239 = pneg %p74
        %s240 = sld [smem:[#allocation3 + %s28]]
        %p241 = scmp.lt.s32.totalorder %s240, 2
        %s242 = scalar_select %p241, %s240, 2
        %s243 = scalar_lea.vmem %s3, %s242
        %p244 = pneg %p105
        %p245 = pneg %p102
        %p246 = pneg %p131
        %p247 = pneg %p128
        %s248 = sand.u32 %s118, 1
        %s249 = scalar_lea.sflag [#allocation6], %s248
        %s250 = sand.u32 %s118, 1
        %s251 = smul.addr %s250, 128
        %s252 = scalar_lea.vmem [#allocation9], %s251
        %s253 = smul.u32 16, %s28
        %s254 = sld [smem:[#allocation3 + %s28]]
        %s255 = sld [smem:[#allocation3 + %s28]]
        %p256 = scmp.lt.s32.totalorder %s255, 2
        %s257 = scalar_select %p256, %s255, 2
        %s258 = scalar_lea.vmem %s3, %s257
        %s259 = sld [smem:[#allocation3 + %s28]]
        %s260 = smul.u32 16, %s28
        %v261 = vld [vmem:[%s212] sm:$0xff]
        %v262 = vld [vmem:[%s212 + $0x8] sm:$0xff]
        %v263 = vld [vmem:[%s212 + $0x10] sm:$0xff]
        %v264 = vld [vmem:[%s212 + $0x18] sm:$0xff]
        %v265 = vld [vmem:[%s212 + $0x20] sm:$0xff]
        %v266 = vld [vmem:[%s212 + $0x28] sm:$0xff]
        %v267 = vld [vmem:[%s212 + $0x30] sm:$0xff]
        %v268 = vld [vmem:[%s212 + $0x38] sm:$0xff]
        %v269 = vld [vmem:[%s212 + $0x40] sm:$0xff]
        %v270 = vld [vmem:[%s212 + $0x48] sm:$0xff]
        %v271 = vld [vmem:[%s212 + $0x50] sm:$0xff]
        %v272 = vld [vmem:[%s212 + $0x58] sm:$0xff]
        %v273 = vld [vmem:[%s212 + $0x60] sm:$0xff]
        %v274 = vld [vmem:[%s212 + $0x68] sm:$0xff]
        %v275 = vld [vmem:[%s212 + $0x70] sm:$0xff]
        %v276 = vld [vmem:[%s212 + $0x78] sm:$0xff]
        %v277 = vld [vmem:[%s221] sm:$0xff]
        %v278 = vld [vmem:[%s221 + $0x8] sm:$0xff]
        %v279 = vld [vmem:[%s221 + $0x10] sm:$0xff]
        %v280 = vld [vmem:[%s221 + $0x18] sm:$0xff]
        %v281 = vld [vmem:[%s221 + $0x20] sm:$0xff]
        %v282 = vld [vmem:[%s221 + $0x28] sm:$0xff]
        %v283 = vld [vmem:[%s221 + $0x30] sm:$0xff]
        %v284 = vld [vmem:[%s221 + $0x38] sm:$0xff]
        %v285 = vld [vmem:[%s221 + $0x40] sm:$0xff]
        %v286 = vld [vmem:[%s221 + $0x48] sm:$0xff]
        %v287 = vld [vmem:[%s221 + $0x50] sm:$0xff]
        %v288 = vld [vmem:[%s221 + $0x58] sm:$0xff]
        %v289 = vld [vmem:[%s221 + $0x60] sm:$0xff]
        %v290 = vld [vmem:[%s221 + $0x68] sm:$0xff]
        %v291 = vld [vmem:[%s221 + $0x70] sm:$0xff]
        %v292 = vld [vmem:[%s221 + $0x78] sm:$0xff]
        %v293 = vld [vmem:[%s258] sm:$0x1]
        %v295 = vlaneseq
        %v296 = vshrl.u32 %v295, 7
        %v297 = vsub.s32 0, %v296
        %v298 = vrot.slane %v293, %v297
        %300 = vmatprep.subr.mxu0 0.0
        %301 = vmatpush1.msra.mxu0 %v277
        %302 = vmatprep.subr.mxu0 0.0
        %303 = vmatpush1.msra.mxu0 %v278
        %304 = vmatprep.subr.mxu0 0.0
        %305 = vmatpush1.msra.mxu0 %v279
        %306 = vmatprep.subr.mxu0 0.0
        %307 = vmatpush1.msra.mxu0 %v280
        %308 = vmatprep.subr.mxu0 0.0
        %309 = vmatpush1.msra.mxu0 %v281
        %310 = vmatprep.subr.mxu0 0.0
        %311 = vmatpush1.msra.mxu0 %v282
        %312 = vmatprep.subr.mxu0 0.0
        %313 = vmatpush1.msra.mxu0 %v283
        %314 = vmatprep.subr.mxu0 0.0
        %315 = vmatpush1.msra.mxu0 %v284
        %316 = vmatprep.subr.mxu0 0.0
        %317 = vmatpush1.msra.mxu0 %v285
        %318 = vmatprep.subr.mxu0 0.0
        %319 = vmatpush1.msra.mxu0 %v286
        %320 = vmatprep.subr.mxu0 0.0
        %321 = vmatpush1.msra.mxu0 %v287
        %322 = vmatprep.subr.mxu0 0.0
        %323 = vmatpush1.msra.mxu0 %v288
        %324 = vmatprep.subr.mxu0 0.0
        %325 = vmatpush1.msra.mxu0 %v289
        %326 = vmatprep.subr.mxu0 0.0
        %327 = vmatpush1.msra.mxu0 %v290
        %328 = vmatprep.subr.mxu0 0.0
        %329 = vmatpush1.msra.mxu0 %v291
        %330 = vmatprep.subr.mxu0 0.0
        %331 = vmatpush1.msra.mxu0 %v292
        %332 = vmatprep.subr.mxu0 0.0
        %333 = vmatpush1.msra.mxu0 0.0
        %334 = vmatprep.subr.mxu0 0.0
        %335 = vmatpush1.msra.mxu0 0.0
        %336 = vmatprep.subr.mxu0 0.0
        %337 = vmatpush1.msra.mxu0 0.0
        %338 = vmatprep.subr.mxu0 0.0
        %339 = vmatpush1.msra.mxu0 0.0
        %340 = vmatprep.subr.mxu0 0.0
        %341 = vmatpush1.msra.mxu0 0.0
        %342 = vmatprep.subr.mxu0 0.0
        %343 = vmatpush1.msra.mxu0 0.0
        %344 = vmatprep.subr.mxu0 0.0
        %345 = vmatpush1.msra.mxu0 0.0
        %346 = vmatprep.subr.mxu0 0.0
        %347 = vmatpush1.msra.mxu0 0.0
        %348 = vmatprep.subr.mxu0 0.0
        %349 = vmatpush1.msra.mxu0 0.0
        %350 = vmatprep.subr.mxu0 0.0
        %351 = vmatpush1.msra.mxu0 0.0
        %352 = vmatprep.subr.mxu0 0.0
        %353 = vmatpush1.msra.mxu0 0.0
        %354 = vmatprep.subr.mxu0 0.0
        %355 = vmatpush1.msra.mxu0 0.0
        %356 = vmatprep.subr.mxu0 0.0
        %357 = vmatpush1.msra.mxu0 0.0
        %358 = vmatprep.subr.mxu0 0.0
        %359 = vmatpush1.msra.mxu0 0.0
        %360 = vmatprep.subr.mxu0 0.0
        %361 = vmatpush1.msra.mxu0 0.0
        %362 = vmatprep.subr.mxu0 0.0
        %363 = vmatpush1.msra.mxu0 0.0
        %364 = vmatprep.mubr.f32.mxu0 0.0
        %365 = vmatmul.mubr.f32.gmra.mrb[0].mxu0 %v261
        %v366 = vpop.f32.mrb[0].mxu0
        %v367 = vadd.f32 %v298, %v366
        %v368 = vpop.f32.mrb[0].mxu0
        %369 = vmatprep.mubr.f32.mxu0 0.0
        %370 = vmatmul.mubr.f32.gmra.mrb[0].mxu0 %v262
        %v371 = vpop.f32.mrb[0].mxu0
        %v372 = vadd.f32 %v298, %v371
        %v373 = vpop.f32.mrb[0].mxu0
        %374 = vmatprep.mubr.f32.mxu0 0.0
        %375 = vmatmul.mubr.f32.gmra.mrb[0].mxu0 %v263
        %v376 = vpop.f32.mrb[0].mxu0
        %v377 = vadd.f32 %v298, %v376
        %v378 = vpop.f32.mrb[0].mxu0
        %379 = vmatprep.mubr.f32.mxu0 0.0
        %380 = vmatmul.mubr.f32.gmra.mrb[0].mxu0 %v264
        %v381 = vpop.f32.mrb[0].mxu0
        %v382 = vadd.f32 %v298, %v381
        %v383 = vpop.f32.mrb[0].mxu0
        %384 = vmatprep.mubr.f32.mxu0 0.0
        %385 = vmatmul.mubr.f32.gmra.mrb[0].mxu0 %v265
        %v386 = vpop.f32.mrb[0].mxu0
        %v387 = vadd.f32 %v298, %v386
        %v388 = vpop.f32.mrb[0].mxu0
        %389 = vmatprep.mubr.f32.mxu0 0.0
        %390 = vmatmul.mubr.f32.gmra.mrb[0].mxu0 %v266
        %v391 = vpop.f32.mrb[0].mxu0
        %v392 = vadd.f32 %v298, %v391
        %v393 = vpop.f32.mrb[0].mxu0
        %394 = vmatprep.mubr.f32.mxu0 0.0
        %395 = vmatmul.mubr.f32.gmra.mrb[0].mxu0 %v267
        %v396 = vpop.f32.mrb[0].mxu0
        %v397 = vadd.f32 %v298, %v396
        %v398 = vpop.f32.mrb[0].mxu0
        %399 = vmatprep.mubr.f32.mxu0 0.0
        %400 = vmatmul.mubr.f32.gmra.mrb[0].mxu0 %v268
        %v401 = vpop.f32.mrb[0].mxu0
        %v402 = vadd.f32 %v298, %v401
        %v403 = vpop.f32.mrb[0].mxu0
        %404 = vmatprep.mubr.f32.mxu0 0.0
        %405 = vmatmul.mubr.f32.gmra.mrb[0].mxu0 %v269
        %v406 = vpop.f32.mrb[0].mxu0
        %v407 = vadd.f32 %v298, %v406
        %v408 = vpop.f32.mrb[0].mxu0
        %409 = vmatprep.mubr.f32.mxu0 0.0
        %410 = vmatmul.mubr.f32.gmra.mrb[0].mxu0 %v270
        %v411 = vpop.f32.mrb[0].mxu0
        %v412 = vadd.f32 %v298, %v411
        %v413 = vpop.f32.mrb[0].mxu0
        %414 = vmatprep.mubr.f32.mxu0 0.0
        %415 = vmatmul.mubr.f32.gmra.mrb[0].mxu0 %v271
        %v416 = vpop.f32.mrb[0].mxu0
        %v417 = vadd.f32 %v298, %v416
        %v418 = vpop.f32.mrb[0].mxu0
        %419 = vmatprep.mubr.f32.mxu0 0.0
        %420 = vmatmul.mubr.f32.gmra.mrb[0].mxu0 %v272
        %v421 = vpop.f32.mrb[0].mxu0
        %v422 = vadd.f32 %v298, %v421
        %v423 = vpop.f32.mrb[0].mxu0
        %424 = vmatprep.mubr.f32.mxu0 0.0
        %425 = vmatmul.mubr.f32.gmra.mrb[0].mxu0 %v273
        %v426 = vpop.f32.mrb[0].mxu0
        %v427 = vadd.f32 %v298, %v426
        %v428 = vpop.f32.mrb[0].mxu0
        %429 = vmatprep.mubr.f32.mxu0 0.0
        %430 = vmatmul.mubr.f32.gmra.mrb[0].mxu0 %v274
        %v431 = vpop.f32.mrb[0].mxu0
        %v432 = vadd.f32 %v298, %v431
        %v433 = vpop.f32.mrb[0].mxu0
        %434 = vmatprep.mubr.f32.mxu0 0.0
        %435 = vmatmul.mubr.f32.gmra.mrb[0].mxu0 %v275
        %v436 = vpop.f32.mrb[0].mxu0
        %v437 = vadd.f32 %v298, %v436
        %v438 = vpop.f32.mrb[0].mxu0
        %439 = vmatprep.mubr.f32.mxu0 0.0
        %440 = vmatmul.mubr.f32.gmra.mrb[0].mxu0 %v276
        %v441 = vpop.f32.mrb[0].mxu0
        %v442 = vadd.f32 %v298, %v441
        %v443 = vpop.f32.mrb[0].mxu0
        %444 = vdwg.mxu0
        %445 = vst [vmem:[%s252] sm:$0xff] %v367
        %446 = vst [vmem:[%s252 + $0x8] sm:$0xff] %v372
        %447 = vst [vmem:[%s252 + $0x10] sm:$0xff] %v377
        %448 = vst [vmem:[%s252 + $0x18] sm:$0xff] %v382
        %449 = vst [vmem:[%s252 + $0x20] sm:$0xff] %v387
        %450 = vst [vmem:[%s252 + $0x28] sm:$0xff] %v392
        %451 = vst [vmem:[%s252 + $0x30] sm:$0xff] %v397
        %452 = vst [vmem:[%s252 + $0x38] sm:$0xff] %v402
        %453 = vst [vmem:[%s252 + $0x40] sm:$0xff] %v407
        %454 = vst [vmem:[%s252 + $0x48] sm:$0xff] %v412
        %455 = vst [vmem:[%s252 + $0x50] sm:$0xff] %v417
        %456 = vst [vmem:[%s252 + $0x58] sm:$0xff] %v422
        %457 = vst [vmem:[%s252 + $0x60] sm:$0xff] %v427
        %458 = vst [vmem:[%s252 + $0x68] sm:$0xff] %v432
        %459 = vst [vmem:[%s252 + $0x70] sm:$0xff] %v437
        %460 = vst [vmem:[%s252 + $0x78] sm:$0xff] %v442
        %s461 = sand.u32 %s118, 1
        %s462 = scalar_lea.sflag [#allocation6], %s461
        %s463 = sand.u32 %s118, 1
        %s464 = smul.addr %s463, 128
        %s465 = scalar_lea.vmem [#allocation9], %s464
        // Predicated region
        $region41: #{_grouped_linear.1} parent=31 // pred_check
          %p466 = pneg %p128
        $region42: #{_grouped_linear.1} parent=31 // pred_check_branch
          %468 = sbr.rel (%p466) target = $region44
        $region43: #{_grouped_linear.1} parent=31 // pred_region
          %s469 = smul.u32 16, %s28
          %s471 = ssub.s32 2048, 2048
          %472 = vsyncadd %s462, %s471
          %s473 = smul.addr %s469, 128
          %s474 = scalar_lea.hbm %s4, %s473
          %s475 = sshll.u32 %s465, 4
          %s476 = int_to_ptr.vmem [resolvable:$true] %s475
          %481 = dma.vmem_to_hbm [thread:$0]  %s476, 2048, %s474, %s462, 128, 128, 8
        $region44: #{_grouped_linear.1} parent=31 // pred_fallthru
          _
      $region32: #{_grouped_linear.1} parent=5 // pred_fallthru
        _
      %p482 = scmp.le.s32.totalorder 2, %s23
      // Predicated region
      $region45: #{_grouped_linear.1} parent=5 // pred_check
        %p483 = pneg %p482
      $region46: #{_grouped_linear.1} parent=5 // pred_check_branch
        %485 = sbr.rel (%p483) target = $region48
      $region47: #{_grouped_linear.1} parent=5 // pred_region
        %s486 = ssub.s32 %s23, 2
        // Predicated region
        $region49: #{_grouped_linear.1} parent=47 // pred_check
          %p487 = pneg %p134
        $region50: #{_grouped_linear.1} parent=47 // pred_check_branch
          %489 = sbr.rel (%p487) target = $region52
        $region51: #{_grouped_linear.1} parent=47 // pred_region
          %s490 = sand.u32 %s119, 1
          %s491 = scalar_lea.sflag [#allocation6], %s490
          %s492 = sand.u32 %s119, 1
          %s493 = smul.addr %s492, 128
          %s494 = scalar_lea.vmem [#allocation9], %s493
          %495 = dma.done %s491, 2048
        $region52: #{_grouped_linear.1} parent=47 // pred_fallthru
          _
      $region48: #{_grouped_linear.1} parent=5 // pred_fallthru
        _
    $region6: #{_grouped_linear.1} parent=1 // loop_footer
      %s27 = sadd.s32 1, %s23
    $region7: #{_grouped_linear.1} parent=1 // loop_footer_branch
      %22 = sbr.rel target = $region3
    $region8: #{_grouped_linear.1} parent=1 // loop_exit
      _
    %496 = vsyncpa [#allocation5], 1
    %s497 = scalar_lea.sflag [#allocation5], 1
    %498 = vsyncpa %s497, 1
    %499 = vsyncpa [#allocation8], 1
    %s500 = scalar_lea.sflag [#allocation8], 1
    %501 = vsyncpa %s500, 1
    %502 = vsyncpa [#allocation6], 1
    %s503 = scalar_lea.sflag [#allocation6], 1
    %504 = vsyncpa %s503, 1

</llo_original>
